<compile_context>
chip_gen: v5e
topology: v5e:2x2
jax: 0.10.0
libtpu: 0.0.40
codegen_flags: <defaults>
</compile_context>

<pallas_src>
import functools

import jax
import jax.numpy as jnp
from jax.experimental import pallas as pl
from jax.experimental.pallas import tpu as pltpu


def _pow_int_or_float(x, gamma):
    """x**gamma with small integer gamma specialized to VPU multiplies (no EUP pow)."""
    if float(gamma) == int(gamma) and 0 <= int(gamma) <= 8:
        gi = int(gamma)
        if gi == 0:
            return jnp.ones_like(x)
        out = x
        for _ in range(gi - 1):
            out = out * x
        return out
    return jnp.power(x, jnp.float32(gamma))


def _focal_terms(x, t, gamma):
    """Per-sample (1, TN) cross-entropy + focal modulator; also returns the hit mask."""
    # Numerically stable log-softmax along the class (sublane) axis.
    m = jnp.max(x, axis=0, keepdims=True)                          # (1, TN)
    sh = x - m                                                     # (C, TN)
    # TODO(synk): if a bundle dump shows EUP saturation on v6e/v7x, compute
    # jnp.exp(sh) in bf16 and accumulate the sum in f32 (not on v5e).
    lse = jnp.log(jnp.sum(jnp.exp(sh), axis=0, keepdims=True))     # (1, TN)

    # Target gather: where-select + sublane sum (no bool->f32 cast / extra mul).
    row = jax.lax.broadcasted_iota(jnp.int32, x.shape, 0)          # (C, TN)
    hit = row == t                                                 # (C, TN) bool
    logit_t = jnp.sum(jnp.where(hit, sh, 0.0), axis=0, keepdims=True)

    ce = lse - logit_t                                             # (1, TN)
    pt = jnp.exp(-ce)
    one_m_pt = jnp.maximum(1.0 - pt, 0.0)   # clamp: pow of tiny negative -> NaN
    return hit, ce, _pow_int_or_float(one_m_pt, gamma)


def _focal_kernel_alpha(logits_ref, tgt_ref, alpha_ref, out_ref, *, gamma):
    """alpha[targets] gathered in-kernel (HBM-bound v5e & older: no extra DMA)."""
    x = logits_ref[...].astype(jnp.float32)                        # (C, TN)
    t = tgt_ref[...]                                               # (1, TN) int32
    a = alpha_ref[...].astype(jnp.float32)                         # (C, 1)
    hit, ce, mod = _focal_terms(x, t, gamma)
    alpha_t = jnp.sum(jnp.where(hit, a, 0.0), axis=0, keepdims=True)
    out_ref[...] = alpha_t * mod * ce                              # (1, TN)


def _focal_kernel_noalpha(logits_ref, tgt_ref, out_ref, *, gamma):
    """Unweighted per-sample loss; alpha[targets] applied in the wrapper epilogue
    (v6e/v7x: removes one cross-sublane reduction from the kernel)."""
    x = logits_ref[...].astype(jnp.float32)                        # (C, TN)
    t = tgt_ref[...]                                               # (1, TN) int32
    _, ce, mod = _focal_terms(x, t, gamma)
    out_ref[...] = mod * ce                                        # (1, TN)


def _alpha_in_kernel_default():
    """Keep the alpha gather inside the kernel on purely HBM-bound generations."""
    try:
        kind = jax.devices()[0].device_kind.lower()
    except Exception:
        kind = ""
    return any(v in kind for v in ("v2", "v3", "v4", "v5"))


def focal_loss_class_major(logits_cm, targets, alpha, gamma=2.0, *,
                           tile_n=65536, alpha_in_kernel=None):
    """Focal loss from class-major logits.

    logits_cm: [C, N] (class-major / lane-dense batch), targets: [N] int,
    alpha: [C] -> scalar f32 mean focal loss.
    """
    C, N = logits_cm.shape
    itemsize = jnp.dtype(logits_cm.dtype).itemsize
    if alpha_in_kernel is None:
        alpha_in_kernel = _alpha_in_kernel_default()

    # --- Tile selection ------------------------------------------------------
    # Keep the double-buffered working set (logits + targets + out blocks)
    # around <=20 MiB so it fits scoped VMEM on every generation (v7x has only
    # 64 MiB physical / 32 MiB default scoped per TensorCore).
    pipe_budget = 20 * 1024 * 1024
    bytes_per_lane = C * itemsize + 4 + 4      # logits + targets + per-sample out
    max_tile_vmem = max(128, (pipe_budget // (2 * bytes_per_lane)) // 128 * 128)

    n_lanes = pl.cdiv(N, 128) * 128
    if N <= 128:
        tile = N                               # single full-extent block
    else:
        tile = min(int(tile_n), max_tile_vmem, n_lanes)
        tile = max(128, (tile // 128) * 128)
        # v7x: guarantee >=2 (target 8) grid steps so the "parallel" axis can
        # shard across both TensorCores, without shrinking below ~1024 lanes
        # (64 KiB blocks) just to add steps.
        split = max(1024, (n_lanes // 8) // 128 * 128)
        split = min(split, max(128, (n_lanes // 2) // 128 * 128))
        tile = min(tile, split)
    num_blocks = pl.cdiv(N, tile)

    # --- Operands (no explicit padding; Pallas handles the ragged last block) -
    tgt2d = targets.astype(jnp.int32).reshape(1, N)                # lane-dense
    kernel_args = [logits_cm, tgt2d]
    in_specs = [
        # NOTE: if profiling still shows exposed DMA at multi-MiB blocks, sweep
        # pipeline_mode=pl.Buffered(3) on this spec.
        pl.BlockSpec((C, tile), lambda i: (0, i)),                 # logits tile
        pl.BlockSpec((1, tile), lambda i: (0, i)),                 # targets
    ]
    if alpha_in_kernel:
        kernel = functools.partial(_focal_kernel_alpha, gamma=float(gamma))
        kernel_args.append(alpha.reshape(C, 1))
        in_specs.append(pl.BlockSpec((C, 1), lambda i: (0, 0)))    # shared alpha
    else:
        kernel = functools.partial(_focal_kernel_noalpha, gamma=float(gamma))

    per_sample = pl.pallas_call(
        kernel,
        out_shape=jax.ShapeDtypeStruct((1, N), jnp.float32),
        grid_spec=pltpu.PrefetchScalarGridSpec(
            num_scalar_prefetch=0,
            grid=(num_blocks,),
            in_specs=in_specs,
            out_specs=pl.BlockSpec((1, tile), lambda i: (0, i)),
        ),
        compiler_params=pltpu.CompilerParams(
            # No cross-step carry -> fully parallel grid (both TCs on v7x).
            dimension_semantics=("parallel",),
            # >= v5e's 16 MiB default, == v7x's 32 MiB default scoped VMEM,
            # well under physical VMEM everywhere; tiles are sized to fit.
            vmem_limit_bytes=32 * 1024 * 1024,
        ),
    )(*kernel_args)

    # Tiny epilogue: drop ragged-block lanes, (optionally) weight by alpha[t],
    # mean over the true batch.  Garbage lanes past N never reach the sum.
    vals = per_sample[0, :N]
    if not alpha_in_kernel:
        vals = vals * alpha.astype(jnp.float32)[targets]
    return jnp.sum(vals) / jnp.float32(N)


def focal_loss(logits, targets, alpha, gamma=2.0, **kwargs):
    """PyTorch-interface entry point: logits [N, C] (like F.cross_entropy).

    The transpose below is one extra HBM pass; producers that can emit
    class-major [C, N] logits (e.g. by swapping the final projection's operand
    order) should call focal_loss_class_major directly to avoid it.
    """
    return focal_loss_class_major(jnp.transpose(logits), targets, alpha,
                                  gamma, **kwargs)


def _focal_loss_ref(logits, targets, alpha, gamma=2.0):
    logp = jax.nn.log_softmax(logits.astype(jnp.float32), axis=-1)
    ce = -jnp.take_along_axis(logp, targets[:, None], axis=-1)[:, 0]
    pt = jnp.exp(-ce)
    return jnp.mean(alpha[targets] * (1.0 - pt) ** gamma * ce)


if __name__ == "__main__":
    key = jax.random.PRNGKey(0)
    k1, k2, k3 = jax.random.split(key, 3)

    N, C = 32, 16          # batch of 32 samples, 16 classes
    gamma = 2.0

    logits = jax.random.normal(k1, (N, C), dtype=jnp.float32)
    targets = jax.random.randint(k2, (N,), 0, C, dtype=jnp.int32)
    # deterministic per-class alpha weights (synthetic, like nn.Parameter init)
    alpha = jax.random.uniform(k3, (C,), dtype=jnp.float32,
                               minval=0.25, maxval=1.0)

    ref = _focal_loss_ref(logits, targets, alpha, gamma=gamma)

    # Exercise the auto (device-kind based) path plus both kernel variants
    # (alpha gathered in-kernel vs. applied in the epilogue).
    for aik in (None, True, False):
        loss = focal_loss(logits, targets, alpha, gamma=gamma, alpha_in_kernel=aik)
        loss = jax.block_until_ready(loss)
        assert jnp.allclose(loss, ref, rtol=1e-5, atol=1e-6), (aik, loss, ref)

    # Ragged / multi-block path (N not a multiple of 128 -> 3 grid steps).
    N2 = 300
    k4, k5 = jax.random.split(k1)
    logits2 = jax.random.normal(k4, (N2, C), dtype=jnp.float32)
    targets2 = jax.random.randint(k5, (N2,), 0, C, dtype=jnp.int32)
    ref2 = _focal_loss_ref(logits2, targets2, alpha, gamma=gamma)
    loss2 = jax.block_until_ready(focal_loss(logits2, targets2, alpha, gamma=gamma))
    assert jnp.allclose(loss2, ref2, rtol=1e-5, atol=1e-6), (loss2, ref2)

    print("KERNEL_OK")
</pallas_src>

<mosaic_0001>
module attributes {stable_mosaic.version = 11 : i64} {
  func.func @_focal_kernel_noalpha(%arg0: i32, %arg1: memref<16x32xf32, #tpu.memory_space<vmem>>, %arg2: memref<1x32xi32, #tpu.memory_space<vmem>>, %arg3: memref<1x32xf32, #tpu.memory_space<vmem>>) attributes {dimension_semantics = [#tpu.dimension_semantics<parallel>], iteration_bounds = array<i64: 1>, scalar_prefetch = 0 : i64, scratch_operands = 0 : i64, tpu.core_type = #tpu.core_type<tc>, window_params = [{transform_indices = @transform_0, window_bounds = array<i64: 16, 32>}, {transform_indices = @transform_1, window_bounds = array<i64: 1, 32>}, {transform_indices = @transform_2, window_bounds = array<i64: 1, 32>}]} {
    %c0 = arith.constant 0 : index
    %c0_0 = arith.constant 0 : index
    %0 = vector.load %arg1[%c0, %c0_0] : memref<16x32xf32, #tpu.memory_space<vmem>>, vector<16x32xf32>
    %c0_1 = arith.constant 0 : index
    %c0_2 = arith.constant 0 : index
    %1 = vector.load %arg2[%c0_1, %c0_2] : memref<1x32xi32, #tpu.memory_space<vmem>>, vector<1x32xi32>
    %cst = arith.constant dense<0xFF800000> : vector<32xf32>
    %2 = vector.multi_reduction <maximumf>, %0, %cst [0] : vector<16x32xf32> to vector<32xf32>
    %3 = vector.shape_cast %2 : vector<32xf32> to vector<1x32xf32>
    %4 = vector.broadcast %3 : vector<1x32xf32> to vector<16x32xf32>
    %5 = arith.subf %0, %4 : vector<16x32xf32>
    %6 = math.exp %5 : vector<16x32xf32>
    %cst_3 = arith.constant dense<0.000000e+00> : vector<32xf32>
    %7 = vector.multi_reduction <add>, %6, %cst_3 [0] : vector<16x32xf32> to vector<32xf32>
    %8 = vector.shape_cast %7 : vector<32xf32> to vector<1x32xf32>
    %9 = math.log %8 : vector<1x32xf32>
    %10 = tpu.iota {dimensions = array<i32: 0>} : vector<16x32xi32>
    %11 = vector.broadcast %1 : vector<1x32xi32> to vector<16x32xi32>
    %12 = arith.cmpi eq, %10, %11 : vector<16x32xi32>
    %cst_4 = arith.constant 0.000000e+00 : f32
    %13 = vector.broadcast %cst_4 : f32 to vector<16x32xf32>
    %14 = arith.select %12, %5, %13 : vector<16x32xi1>, vector<16x32xf32>
    %cst_5 = arith.constant dense<0.000000e+00> : vector<32xf32>
    %15 = vector.multi_reduction <add>, %14, %cst_5 [0] : vector<16x32xf32> to vector<32xf32>
    %16 = vector.shape_cast %15 : vector<32xf32> to vector<1x32xf32>
    %17 = arith.subf %9, %16 : vector<1x32xf32>
    %cst_6 = arith.constant 0.000000e+00 : f32
    %18 = vector.broadcast %cst_6 : f32 to vector<1x32xf32>
    %19 = arith.subf %18, %17 : vector<1x32xf32>
    %20 = math.exp %19 : vector<1x32xf32>
    %cst_7 = arith.constant 1.000000e+00 : f32
    %21 = vector.broadcast %cst_7 : f32 to vector<1x32xf32>
    %22 = arith.subf %21, %20 : vector<1x32xf32>
    %cst_8 = arith.constant 0.000000e+00 : f32
    %23 = vector.broadcast %cst_8 : f32 to vector<1x32xf32>
    %24 = arith.maximumf %22, %23 : vector<1x32xf32>
    %25 = arith.mulf %24, %24 : vector<1x32xf32>
    %26 = arith.mulf %25, %17 : vector<1x32xf32>
    %c0_9 = arith.constant 0 : index
    %c0_10 = arith.constant 0 : index
    %27 = vector.load %arg3[%c0_9, %c0_10] : memref<1x32xf32, #tpu.memory_space<vmem>>, vector<1x32xf32>
    tpu.vector_store %arg3[%c0_9, %c0_10], %26 {strides = array<i32>} : memref<1x32xf32, #tpu.memory_space<vmem>>, vector<1x32xf32>,
    return
  }
  func.func @transform_0(%arg0: i32) -> (i32, i32) {
    %c0_i32 = arith.constant 0 : i32
    %c0_i32_0 = arith.constant 0 : i32
    return %c0_i32, %arg0 : i32, i32
  }
  func.func @transform_1(%arg0: i32) -> (i32, i32) {
    %c0_i32 = arith.constant 0 : i32
    %c0_i32_0 = arith.constant 0 : i32
    return %c0_i32, %arg0 : i32, i32
  }
  func.func @transform_2(%arg0: i32) -> (i32, i32) {
    %c0_i32 = arith.constant 0 : i32
    %c0_i32_0 = arith.constant 0 : i32
    return %c0_i32, %arg0 : i32, i32
  }
}

</mosaic_0001>

<llo_original>
// kernel: tpu_custom_call.1
$region0: #{tpu_custom_call.1}
  #allocation0 [shape = 'u32[]', space=smem, size = 0x4, offset = 0x4, fixed_abs, tag = 'smem constant byte address 0x4 - core index']
  #allocation1 [shape = 'u32[72,128]{1,0:T(1,128)}', space=vmem, size = 0x9000, scoped, tag = 'internal scratch']
  %s0 = inlined_call_operand.hbm [shape: f32[16,32], index: 0, kind: input, shape index: {}]
  %s1 = inlined_call_operand.hbm [shape: s32[1,32], index: 1, kind: input, shape index: {}]
  %s2 = inlined_call_operand.hbm [shape: f32[1,32], index: 2, kind: output, shape index: {}]
  %s3 = sld [smem:[#allocation0]]
  $region26: #{tpu_custom_call.1} parent=0
    _
  %s5 = ssub.s32 1, %s3
  %s6 = scalar_select 0, %s5, %s3
  $region1: #{tpu_custom_call.1} parent=0
    #allocation2 [shape = 'u8[8192]{0}', space=vmem, size = 0x2000, scoped, tag = 'input window, operand 0, single buffered']
    #allocation3 [shape = 's32[1]{0}', space=sflag, size = 0x4, scoped, tag = 'scoped memory for tpu_custom_call.1']
    #allocation4 [shape = 's32[1]{0}', space=sflag, size = 0x4, scoped, tag = 'scoped memory for tpu_custom_call.1']
    #allocation5 [shape = 'u8[512]{0}', space=vmem, size = 0x400, scoped, tag = 'input window, operand 1, single buffered']
    #allocation6 [shape = 's32[1]{0}', space=sflag, size = 0x4, scoped, tag = 'scoped memory for tpu_custom_call.1']
    #allocation7 [shape = 'u8[512]{0}', space=vmem, size = 0x400, scoped, tag = 'output window, operand 0, single buffered']
    %7 = vsyncpa [#allocation3], 0
    %8 = vsyncpa [#allocation6], 0
    %9 = vsyncpa [#allocation4], 0
    // Predicated region
    $region2: #{tpu_custom_call.1} parent=1 // pred_check
      _
    $region3: #{tpu_custom_call.1} parent=1 // pred_check_branch
      %11 = sbr.rel (0) target = $region5
    $region4: #{tpu_custom_call.1} parent=1 // pred_region
      %13 = vsyncadd [#allocation3], 0
      %s14 = sshll.u32 %s0, 4
      %s15 = int_to_ptr.hbm [resolvable:$true] %s14
      %s16 = sshll.u32 [#allocation2], 4
      %s17 = int_to_ptr.vmem [resolvable:$true] %s16
      %22 = dma.hbm_to_vmem [thread:$0]  %s15, 256, %s17, [#allocation3], 128, 128, 8
    $region5: #{tpu_custom_call.1} parent=1 // pred_fallthru
      _
    // Predicated region
    $region6: #{tpu_custom_call.1} parent=1 // pred_check
      _
    $region7: #{tpu_custom_call.1} parent=1 // pred_check_branch
      %24 = sbr.rel (0) target = $region9
    $region8: #{tpu_custom_call.1} parent=1 // pred_region
      %26 = vsyncadd [#allocation6], 0
      %s28 = sshll.u32 %s1, 4
      %s29 = int_to_ptr.hbm [resolvable:$true] %s28
      %s30 = sshll.u32 [#allocation5], 4
      %s31 = int_to_ptr.vmem [resolvable:$true] %s30
      %33 = dma.hbm_to_vmem [thread:$0]  %s29, 16, %s31, [#allocation6]
    $region9: #{tpu_custom_call.1} parent=1 // pred_fallthru
      _
    // Predicated region
    $region10: #{tpu_custom_call.1} parent=1 // pred_check
      _
    $region11: #{tpu_custom_call.1} parent=1 // pred_check_branch
      %35 = sbr.rel (0) target = $region13
    $region12: #{tpu_custom_call.1} parent=1 // pred_region
      %37 = dma.done [#allocation3], 256
    $region13: #{tpu_custom_call.1} parent=1 // pred_fallthru
      _
    // Predicated region
    $region14: #{tpu_custom_call.1} parent=1 // pred_check
      _
    $region15: #{tpu_custom_call.1} parent=1 // pred_check_branch
      %39 = sbr.rel (0) target = $region17
    $region16: #{tpu_custom_call.1} parent=1 // pred_region
      %41 = dma.done [#allocation6], 16
    $region17: #{tpu_custom_call.1} parent=1 // pred_fallthru
      _
    %v42 = vld [vmem:[#allocation2] sm:$0xff]
    %v43 = vld [vmem:[#allocation2 + $0x8] sm:$0xff]
    %v44 = vld [vmem:[#allocation5] sm:$0x1]
    %vm45 = vcmask 261120
    %v46 = vsel %vm45, %v42, -inf
    %v47 = vsel %vm45, %v43, -inf
    %v48 = vmax.f32 %v46, %v47
    %v49 = vrot.slane %v48, 4
    %v50 = vmax.f32 %v48, %v49
    %v51 = vrot.slane %v50, 2
    %v52 = vmax.f32 %v50, %v51
    %v53 = vrot.slane %v52, 1
    %v54 = vmax.f32 %v52, %v53
    %v55 = vsub.f32 %v42, %v54
    %v56 = vsub.f32 %v43, %v54
    %v57 = vmul.f32 %v55, 1.442695
    %v58 = vpow.pop %v57
    %v59 = vmul.f32 %v56, 1.442695
    %v60 = vpow.pop %v59
    %v61 = vsel %vm45, %v58, 0.0
    %v62 = vsel %vm45, %v60, 0.0
    %v63 = vadd.f32 %v61, %v62
    %v64 = vrot.slane %v63, 4
    %v65 = vadd.f32 %v63, %v64
    %v66 = vrot.slane %v65, 2
    %v67 = vadd.f32 %v65, %v66
    %v68 = vrot.slane %v67, 1
    %v69 = vadd.f32 %v67, %v68
    %v70 = vlog2.pop %v69
    %v71 = vmul.f32 %v70, 0.6931472
    %v72 = vlaneseq
    %v73 = vshrl.u32 %v72, 7
    %v74 = vadd.s32 %v73, 8
    %v75 = vperm.slane %v44, 0
    %vm76 = vcmp.eq.s32.totalorder %v73, %v75
    %vm77 = vcmp.eq.s32.totalorder %v74, %v75
    %v78 = vsel %vm76, %v55, 0.0
    %v79 = vsel %vm77, %v56, 0.0
    %v80 = vsel %vm45, %v78, 0.0
    %v81 = vsel %vm45, %v79, 0.0
    %v82 = vadd.f32 %v80, %v81
    %v83 = vrot.slane %v82, 4
    %v84 = vadd.f32 %v82, %v83
    %v85 = vrot.slane %v84, 2
    %v86 = vadd.f32 %v84, %v85
    %v87 = vrot.slane %v86, 1
    %v88 = vadd.f32 %v86, %v87
    %v89 = vsub.f32 %v71, %v88
    %v90 = vsub.f32 0.0, %v89
    %v91 = vmul.f32 %v90, 1.442695
    %v92 = vpow.pop %v91
    %v93 = vsub.f32 1.0, %v92
    %v94 = vmax.f32 %v93, 0.0
    %v95 = vmul.f32 %v94, %v94
    %v96 = vmul.f32 %v95, %v89
    %vm97 = vcmask 253952
    %98 = vst.msk [vmem:[#allocation7] sm:$0x1] %vm97, %v96
    // Predicated region
    $region18: #{tpu_custom_call.1} parent=1 // pred_check
      _
    $region19: #{tpu_custom_call.1} parent=1 // pred_check_branch
      %100 = sbr.rel (0) target = $region21
    $region20: #{tpu_custom_call.1} parent=1 // pred_region
      %102 = vsyncadd [#allocation4], 0
      %s104 = sshll.u32 [#allocation7], 4
      %s105 = int_to_ptr.vmem [resolvable:$true] %s104
      %s106 = sshll.u32 %s2, 4
      %s107 = int_to_ptr.hbm [resolvable:$true] %s106
      %109 = dma.vmem_to_hbm [thread:$0]  %s105, 16, %s107, [#allocation4]
    $region21: #{tpu_custom_call.1} parent=1 // pred_fallthru
      _
    // Predicated region
    $region22: #{tpu_custom_call.1} parent=1 // pred_check
      _
    $region23: #{tpu_custom_call.1} parent=1 // pred_check_branch
      %111 = sbr.rel (0) target = $region25
    $region24: #{tpu_custom_call.1} parent=1 // pred_region
      %113 = dma.done [#allocation4], 16
    $region25: #{tpu_custom_call.1} parent=1 // pred_fallthru
      _
    %114 = vsyncpa [#allocation3], 1
    %115 = vsyncpa [#allocation6], 1
    %116 = vsyncpa [#allocation4], 1

</llo_original>
